<compile_context>
chip_gen: v5e
topology: v5e:2x2
jax: 0.10.0
libtpu: 0.0.40
codegen_flags: <defaults>
</compile_context>

<pallas_src>
import functools
import math

import jax
import jax.numpy as jnp
from jax.experimental import pallas as pl
from jax.experimental.pallas import tpu as pltpu

BN_EPS = 1e-5
LEAKY_SLOPE = 0.01


# ---------------------------------------------------------------------------
# Pallas kernel: everything lives in the lane-dense [B, N*F] layout.
# ---------------------------------------------------------------------------
def gc_block_kernel(x_ref, m1_ref, g1_ref, be1_ref, m2_ref, g2_ref, be2_ref,
                    o_ref):
    x = x_ref[...].astype(jnp.float32)                      # [B, N*F]

    def graph_conv(y, m_ref):
        # Fused graph convolution: y_flat @ kron(att.T, W)  ==
        # (att @ (y @ W)) flattened to [B, N*F].  One MXU matmul; bf16 operator
        # upcast in-register, f32 accumulation.  Bias omitted (cancelled by BN).
        m = m_ref[...].astype(jnp.float32)
        return jnp.dot(y, m, preferred_element_type=jnp.float32)

    def bn_leaky(y, gamma_row, beta_row):
        # Training-mode BatchNorm1d(N*F): per-column batch statistics (biased
        # variance, two-pass for numerical robustness), folded scale/shift.
        mean = jnp.mean(y, axis=0, keepdims=True)            # [1, N*F]
        c = y - mean
        var = jnp.mean(c * c, axis=0, keepdims=True)
        scale = jax.lax.rsqrt(var + BN_EPS) * gamma_row
        z = c * scale + beta_row
        return jnp.maximum(z, LEAKY_SLOPE * z)               # LeakyReLU(0.01)

    y = graph_conv(x, m1_ref)
    y = bn_leaky(y, g1_ref[...], be1_ref[...])
    # TODO(synk): dropout is identity (p_dropout=0 semantics); a nonzero p would
    # need pltpu.prng_seed/prng_random_bits inside the kernel.
    y = graph_conv(y, m2_ref)
    y = bn_leaky(y, g2_ref[...], be2_ref[...])

    o_ref[...] = (y + x).astype(o_ref.dtype)                 # residual, lane-dense store


# ---------------------------------------------------------------------------
# One-time parameter preparation (hoisted out of the per-call path).
# ---------------------------------------------------------------------------
def prepare_gc_block_params(raw_params, node_n, in_features):
    """raw_params = (w1, att1, b1, g1, be1, w2, att2, b2, g2, be2)."""
    (w1, att1, _b1, g1, be1, w2, att2, _b2, g2, be2) = raw_params
    nf = node_n * in_features
    # Fused per-conv operator [N*F, N*F]; bf16 halves the dominant DMA bytes.
    m1 = jnp.kron(att1.T, w1).astype(jnp.bfloat16)
    m2 = jnp.kron(att2.T, w2).astype(jnp.bfloat16)
    # _b1/_b2 dropped: batch-constant bias is exactly removed by train-mode BN.
    g1f = g1.reshape(1, nf).astype(jnp.float32)
    be1f = be1.reshape(1, nf).astype(jnp.float32)
    g2f = g2.reshape(1, nf).astype(jnp.float32)
    be2f = be2.reshape(1, nf).astype(jnp.float32)
    return (m1, g1f, be1f, m2, g2f, be2f)


# ---------------------------------------------------------------------------
# Per-call wrapper (jitted): reshape + single grid-less pallas_call.
# ---------------------------------------------------------------------------
@jax.jit
def _gc_block_flat(x_flat, m1, g1f, be1f, m2, g2f, be2f):
    B, NF = x_flat.shape
    flops = 2 * (2 * B * NF * NF)                 # two fused matmuls
    bytes_accessed = (x_flat.size * 4 + m1.size * 2 + m2.size * 2
                      + 4 * NF * 4 + B * NF * 4)
    cost = pl.CostEstimate(flops=flops, transcendentals=2 * NF,
                           bytes_accessed=bytes_accessed)

    vmem = pl.BlockSpec(memory_space=pltpu.MemorySpace.VMEM)  # whole array resident
    return pl.pallas_call(
        gc_block_kernel,
        in_specs=[vmem] * 7,
        out_specs=vmem,
        out_shape=jax.ShapeDtypeStruct((B, NF), x_flat.dtype),
        cost_estimate=cost,
    )(x_flat, m1, g1f, be1f, m2, g2f, be2f)


def gc_block(x, prepared_params):
    """x: [B, N, F] float32; prepared_params from prepare_gc_block_params."""
    B, N, F = x.shape
    out_flat = _gc_block_flat(x.reshape(B, N * F), *prepared_params)
    return out_flat.reshape(B, N, F)


# ---------------------------------------------------------------------------
# Pure-JAX reference (faithful port of GC_Block.forward, training-mode BN).
# `fused_ops` lets us build the bf16-quantized reference the kernel targets;
# the bias IS included here (kernel omits it) to confirm it is a BN no-op.
# ---------------------------------------------------------------------------
def _gc_block_reference(x, raw_params, fused_ops=None):
    (w1, att1, b1, g1, be1, w2, att2, b2, g2, be2) = raw_params
    B, N, F = x.shape

    if fused_ops is None:
        m1 = jnp.kron(att1.T, w1)
        m2 = jnp.kron(att2.T, w2)
    else:
        m1 = fused_ops[0].astype(jnp.float32)
        m2 = fused_ops[1].astype(jnp.float32)

    def gconv(h_flat, m, bias):
        out = jnp.dot(h_flat, m, precision=jax.lax.Precision.HIGHEST)
        return out + jnp.tile(bias, N)[None, :]

    def bn(h, gamma, beta):
        mean = jnp.mean(h, axis=0, keepdims=True)
        c = h - mean
        var = jnp.mean(c * c, axis=0, keepdims=True)          # biased batch stats
        return c / jnp.sqrt(var + BN_EPS) * gamma[None, :] + beta[None, :]

    def leaky(h):
        return jnp.where(h >= 0, h, LEAKY_SLOPE * h)

    xf = x.reshape(B, N * F)
    y = leaky(bn(gconv(xf, m1, b1), g1, be1))
    y = leaky(bn(gconv(y, m2, b2), g2, be2))                   # dropout is identity
    return (y + xf).reshape(B, N, F)


# ---------------------------------------------------------------------------
if __name__ == "__main__":
    # Small, module-consistent shapes: in_features=16, node_n=16, batch=8
    # (N*F = 256 -> lane-dense; B=8 fills all 8 vreg sublanes).
    B, N, F = 8, 16, 16

    key = jax.random.PRNGKey(0)
    ks = jax.random.split(key, 11)
    stdv = 1.0 / math.sqrt(F)  # GraphConvolution.reset_parameters-style init

    def u(k, shape, lo=-stdv, hi=stdv):
        return jax.random.uniform(k, shape, jnp.float32, lo, hi)

    # gc1 / gc2 parameters: weight [F,F], att [N,N], bias [F]
    w1, att1, b1 = u(ks[0], (F, F)), u(ks[1], (N, N)), u(ks[2], (F,))
    w2, att2, b2 = u(ks[3], (F, F)), u(ks[4], (N, N)), u(ks[5], (F,))
    # bn1 / bn2 affine params over the flattened (N*F,) feature axis.
    g1 = u(ks[6], (N * F,), 0.5, 1.5)
    be1 = u(ks[7], (N * F,), -0.5, 0.5)
    g2 = u(ks[8], (N * F,), 0.5, 1.5)
    be2 = u(ks[9], (N * F,), -0.5, 0.5)

    raw_params = (w1, att1, b1, g1, be1, w2, att2, b2, g2, be2)
    prepared = prepare_gc_block_params(raw_params, node_n=N, in_features=F)
    x = jax.random.normal(ks[10], (B, N, F), jnp.float32)

    out = gc_block(x, prepared)
    jax.block_until_ready(out)

    # Primary check: against the reference using the SAME bf16-quantized fused
    # operators (and the bias the kernel intentionally drops) — the only
    # remaining differences are MXU f32 accumulation/summation order.
    ref_q = _gc_block_reference(x, raw_params, fused_ops=(prepared[0], prepared[3]))
    assert out.shape == (B, N, F) and out.dtype == jnp.float32
    err = float(jnp.max(jnp.abs(out - ref_q)))
    assert jnp.allclose(out, ref_q, atol=1e-2, rtol=1e-2), (
        f"mismatch vs bf16-operator reference: max abs err {err}")
    # (Full-f32 reference `_gc_block_reference(x, raw_params)` differs only by
    #  the intentional bf16 weight quantization, ~1e-2 level.)

    print("KERNEL_OK")
</pallas_src>

<mosaic_0001>
module attributes {stable_mosaic.version = 11 : i64} {
  func.func @gc_block_kernel(%arg0: memref<8x256xf32, #tpu.memory_space<vmem>>, %arg1: memref<256x256xbf16, #tpu.memory_space<vmem>>, %arg2: memref<1x256xf32, #tpu.memory_space<vmem>>, %arg3: memref<1x256xf32, #tpu.memory_space<vmem>>, %arg4: memref<256x256xbf16, #tpu.memory_space<vmem>>, %arg5: memref<1x256xf32, #tpu.memory_space<vmem>>, %arg6: memref<1x256xf32, #tpu.memory_space<vmem>>, %arg7: memref<8x256xf32, #tpu.memory_space<vmem>>) attributes {dimension_semantics = [], scalar_prefetch = 0 : i64, scratch_operands = 0 : i64, tpu.core_type = #tpu.core_type<tc>} {
    %c0 = arith.constant 0 : index
    %c0_0 = arith.constant 0 : index
    %0 = vector.load %arg0[%c0, %c0_0] : memref<8x256xf32, #tpu.memory_space<vmem>>, vector<8x256xf32>
    %c0_1 = arith.constant 0 : index
    %c0_2 = arith.constant 0 : index
    %1 = vector.load %arg1[%c0_1, %c0_2] : memref<256x256xbf16, #tpu.memory_space<vmem>>, vector<256x256xbf16>
    %2 = arith.extf %1 : vector<256x256xbf16> to vector<256x256xf32>
    %cst = arith.constant dense<0.000000e+00> : vector<8x256xf32>
    %3 = tpu.matmul %0, %2, %cst {dimension_numbers = #tpu.dot_dimension_numbers<[1], [0], [0], [1], [0, 0, 1, 1], [], []>} : vector<8x256xf32>, vector<256x256xf32>, vector<8x256xf32> -> vector<8x256xf32>
    %c0_3 = arith.constant 0 : index
    %c0_4 = arith.constant 0 : index
    %4 = vector.load %arg2[%c0_3, %c0_4] : memref<1x256xf32, #tpu.memory_space<vmem>>, vector<1x256xf32>
    %c0_5 = arith.constant 0 : index
    %c0_6 = arith.constant 0 : index
    %5 = vector.load %arg3[%c0_5, %c0_6] : memref<1x256xf32, #tpu.memory_space<vmem>>, vector<1x256xf32>
    %cst_7 = arith.constant dense<0.000000e+00> : vector<256xf32>
    %6 = vector.multi_reduction <add>, %3, %cst_7 [0] : vector<8x256xf32> to vector<256xf32>
    %7 = vector.shape_cast %6 : vector<256xf32> to vector<1x256xf32>
    %cst_8 = arith.constant 8.000000e+00 : f32
    %8 = vector.broadcast %cst_8 : f32 to vector<1x256xf32>
    %9 = arith.divf %7, %8 : vector<1x256xf32>
    %10 = vector.broadcast %9 : vector<1x256xf32> to vector<8x256xf32>
    %11 = arith.subf %3, %10 : vector<8x256xf32>
    %12 = arith.mulf %11, %11 : vector<8x256xf32>
    %cst_9 = arith.constant dense<0.000000e+00> : vector<256xf32>
    %13 = vector.multi_reduction <add>, %12, %cst_9 [0] : vector<8x256xf32> to vector<256xf32>
    %14 = vector.shape_cast %13 : vector<256xf32> to vector<1x256xf32>
    %cst_10 = arith.constant 8.000000e+00 : f32
    %15 = vector.broadcast %cst_10 : f32 to vector<1x256xf32>
    %16 = arith.divf %14, %15 : vector<1x256xf32>
    %cst_11 = arith.constant 9.99999974E-6 : f32
    %17 = vector.broadcast %cst_11 : f32 to vector<1x256xf32>
    %18 = arith.addf %16, %17 : vector<1x256xf32>
    %19 = math.rsqrt %18 : vector<1x256xf32>
    %20 = arith.mulf %19, %4 : vector<1x256xf32>
    %21 = vector.broadcast %20 : vector<1x256xf32> to vector<8x256xf32>
    %22 = arith.mulf %11, %21 : vector<8x256xf32>
    %23 = vector.broadcast %5 : vector<1x256xf32> to vector<8x256xf32>
    %24 = arith.addf %22, %23 : vector<8x256xf32>
    %cst_12 = arith.constant 0.00999999977 : f32
    %25 = vector.broadcast %cst_12 : f32 to vector<8x256xf32>
    %26 = arith.mulf %25, %24 : vector<8x256xf32>
    %27 = arith.maximumf %24, %26 : vector<8x256xf32>
    %c0_13 = arith.constant 0 : index
    %c0_14 = arith.constant 0 : index
    %28 = vector.load %arg4[%c0_13, %c0_14] : memref<256x256xbf16, #tpu.memory_space<vmem>>, vector<256x256xbf16>
    %29 = arith.extf %28 : vector<256x256xbf16> to vector<256x256xf32>
    %cst_15 = arith.constant dense<0.000000e+00> : vector<8x256xf32>
    %30 = tpu.matmul %27, %29, %cst_15 {dimension_numbers = #tpu.dot_dimension_numbers<[1], [0], [0], [1], [0, 0, 1, 1], [], []>} : vector<8x256xf32>, vector<256x256xf32>, vector<8x256xf32> -> vector<8x256xf32>
    %c0_16 = arith.constant 0 : index
    %c0_17 = arith.constant 0 : index
    %31 = vector.load %arg5[%c0_16, %c0_17] : memref<1x256xf32, #tpu.memory_space<vmem>>, vector<1x256xf32>
    %c0_18 = arith.constant 0 : index
    %c0_19 = arith.constant 0 : index
    %32 = vector.load %arg6[%c0_18, %c0_19] : memref<1x256xf32, #tpu.memory_space<vmem>>, vector<1x256xf32>
    %cst_20 = arith.constant dense<0.000000e+00> : vector<256xf32>
    %33 = vector.multi_reduction <add>, %30, %cst_20 [0] : vector<8x256xf32> to vector<256xf32>
    %34 = vector.shape_cast %33 : vector<256xf32> to vector<1x256xf32>
    %cst_21 = arith.constant 8.000000e+00 : f32
    %35 = vector.broadcast %cst_21 : f32 to vector<1x256xf32>
    %36 = arith.divf %34, %35 : vector<1x256xf32>
    %37 = vector.broadcast %36 : vector<1x256xf32> to vector<8x256xf32>
    %38 = arith.subf %30, %37 : vector<8x256xf32>
    %39 = arith.mulf %38, %38 : vector<8x256xf32>
    %cst_22 = arith.constant dense<0.000000e+00> : vector<256xf32>
    %40 = vector.multi_reduction <add>, %39, %cst_22 [0] : vector<8x256xf32> to vector<256xf32>
    %41 = vector.shape_cast %40 : vector<256xf32> to vector<1x256xf32>
    %cst_23 = arith.constant 8.000000e+00 : f32
    %42 = vector.broadcast %cst_23 : f32 to vector<1x256xf32>
    %43 = arith.divf %41, %42 : vector<1x256xf32>
    %cst_24 = arith.constant 9.99999974E-6 : f32
    %44 = vector.broadcast %cst_24 : f32 to vector<1x256xf32>
    %45 = arith.addf %43, %44 : vector<1x256xf32>
    %46 = math.rsqrt %45 : vector<1x256xf32>
    %47 = arith.mulf %46, %31 : vector<1x256xf32>
    %48 = vector.broadcast %47 : vector<1x256xf32> to vector<8x256xf32>
    %49 = arith.mulf %38, %48 : vector<8x256xf32>
    %50 = vector.broadcast %32 : vector<1x256xf32> to vector<8x256xf32>
    %51 = arith.addf %49, %50 : vector<8x256xf32>
    %cst_25 = arith.constant 0.00999999977 : f32
    %52 = vector.broadcast %cst_25 : f32 to vector<8x256xf32>
    %53 = arith.mulf %52, %51 : vector<8x256xf32>
    %54 = arith.maximumf %51, %53 : vector<8x256xf32>
    %55 = arith.addf %54, %0 : vector<8x256xf32>
    %c0_26 = arith.constant 0 : index
    %c0_27 = arith.constant 0 : index
    %56 = vector.load %arg7[%c0_26, %c0_27] : memref<8x256xf32, #tpu.memory_space<vmem>>, vector<8x256xf32>
    tpu.vector_store %arg7[%c0_26, %c0_27], %55 {strides = array<i32>} : memref<8x256xf32, #tpu.memory_space<vmem>>, vector<8x256xf32>,
    return
  }
}

</mosaic_0001>

<llo_original>
// kernel: _gc_block_flat.1
$region0: #{_gc_block_flat.1}
  #allocation0 [shape = 'u32[]', space=smem, size = 0x4, offset = 0x4, fixed_abs, tag = 'smem constant byte address 0x4 - core index']
  #allocation1 [shape = 'u32[72,128]{1,0:T(1,128)}', space=vmem, size = 0x9000, scoped, tag = 'internal scratch']
  %s0 = inlined_call_operand.hbm [shape: f32[8,256], index: 0, kind: input, shape index: {}]
  %s1 = inlined_call_operand.hbm [shape: bf16[256,256], index: 1, kind: input, shape index: {}]
  %s2 = inlined_call_operand.hbm [shape: f32[1,256], index: 2, kind: input, shape index: {}]
  %s3 = inlined_call_operand.vmem [shape: f32[1,256], index: 3, kind: input, shape index: {}]
  %s4 = inlined_call_operand.hbm [shape: bf16[256,256], index: 4, kind: input, shape index: {}]
  %s5 = inlined_call_operand.vmem [shape: f32[1,256], index: 5, kind: input, shape index: {}]
  %s6 = inlined_call_operand.hbm [shape: f32[1,256], index: 6, kind: input, shape index: {}]
  %s7 = inlined_call_operand.hbm [shape: f32[8,256], index: 7, kind: output, shape index: {}]
  %s8 = sld [smem:[#allocation0]]
  $region58: #{_gc_block_flat.1} parent=0
    _
  %s10 = ssub.s32 1, %s8
  %s11 = scalar_select 0, %s10, %s8
  $region1: #{_gc_block_flat.1} parent=0
    #allocation2 [shape = 'u8[8192]{0}', space=vmem, size = 0x2000, scoped, tag = 'input window, operand 0, single buffered']
    #allocation3 [shape = 's32[1]{0}', space=sflag, size = 0x4, scoped, tag = 'scoped memory for _gc_block_flat.1']
    #allocation4 [shape = 's32[1]{0}', space=sflag, size = 0x4, scoped, tag = 'scoped memory for _gc_block_flat.1']
    #allocation5 [shape = 'u8[131072]{0}', space=vmem, size = 0x20000, scoped, tag = 'input window, operand 1, single buffered']
    #allocation6 [shape = 's32[1]{0}', space=sflag, size = 0x4, scoped, tag = 'scoped memory for _gc_block_flat.1']
    #allocation7 [shape = 'u8[1024]{0}', space=vmem, size = 0x400, scoped, tag = 'input window, operand 2, single buffered']
    #allocation8 [shape = 'u8[131072]{0}', space=vmem, size = 0x20000, scoped, tag = 'input window, operand 4, single buffered']
    #allocation9 [shape = 's32[1]{0}', space=sflag, size = 0x4, scoped, tag = 'scoped memory for _gc_block_flat.1']
    #allocation10 [shape = 'u8[1024]{0}', space=vmem, size = 0x400, scoped, tag = 'input window, operand 6, single buffered']
    #allocation11 [shape = 'u8[8192]{0}', space=vmem, size = 0x2000, scoped, tag = 'output window, operand 0, single buffered']
    %12 = vsyncpa [#allocation3], 0
    %13 = vsyncpa [#allocation6], 0
    %14 = vsyncpa [#allocation9], 0
    %15 = vsyncpa [#allocation4], 0
    // Predicated region
    $region2: #{_gc_block_flat.1} parent=1 // pred_check
      _
    $region3: #{_gc_block_flat.1} parent=1 // pred_check_branch
      %17 = sbr.rel (0) target = $region5
    $region4: #{_gc_block_flat.1} parent=1 // pred_region
      %19 = vsyncadd [#allocation3], 0
      %s21 = sshll.u32 %s0, 4
      %s22 = int_to_ptr.hbm [resolvable:$true] %s21
      %s23 = sshll.u32 [#allocation2], 4
      %s24 = int_to_ptr.vmem [resolvable:$true] %s23
      %26 = dma.hbm_to_vmem [thread:$0]  %s22, 256, %s24, [#allocation3]
    $region5: #{_gc_block_flat.1} parent=1 // pred_fallthru
      _
    // Predicated region
    $region6: #{_gc_block_flat.1} parent=1 // pred_check
      _
    $region7: #{_gc_block_flat.1} parent=1 // pred_check_branch
      %28 = sbr.rel (0) target = $region9
    $region8: #{_gc_block_flat.1} parent=1 // pred_region
      %30 = vsyncadd [#allocation6], 0
      %s31 = sshll.u32 %s1, 4
      %s32 = int_to_ptr.hbm [resolvable:$true] %s31
      %s33 = sshll.u32 [#allocation5], 4
      %s34 = int_to_ptr.vmem [resolvable:$true] %s33
      %39 = dma.hbm_to_vmem [thread:$0]  %s32, 4096, %s34, [#allocation6], 128, 128, 8
    $region9: #{_gc_block_flat.1} parent=1 // pred_fallthru
      _
    // Predicated region
    $region10: #{_gc_block_flat.1} parent=1 // pred_check
      _
    $region11: #{_gc_block_flat.1} parent=1 // pred_check_branch
      %41 = sbr.rel (0) target = $region13
    $region12: #{_gc_block_flat.1} parent=1 // pred_region
      %43 = vsyncadd [#allocation6], 0
      %s45 = sshll.u32 %s2, 4
      %s46 = int_to_ptr.hbm [resolvable:$true] %s45
      %s47 = sshll.u32 [#allocation7], 4
      %s48 = int_to_ptr.vmem [resolvable:$true] %s47
      %50 = dma.hbm_to_vmem [thread:$0]  %s46, 32, %s48, [#allocation6]
    $region13: #{_gc_block_flat.1} parent=1 // pred_fallthru
      _
    // Predicated region
    $region14: #{_gc_block_flat.1} parent=1 // pred_check
      _
    $region15: #{_gc_block_flat.1} parent=1 // pred_check_branch
      %52 = sbr.rel (0) target = $region17
    $region16: #{_gc_block_flat.1} parent=1 // pred_region
      _
    $region17: #{_gc_block_flat.1} parent=1 // pred_fallthru
      _
    // Predicated region
    $region18: #{_gc_block_flat.1} parent=1 // pred_check
      _
    $region19: #{_gc_block_flat.1} parent=1 // pred_check_branch
      %54 = sbr.rel (0) target = $region21
    $region20: #{_gc_block_flat.1} parent=1 // pred_region
      %56 = vsyncadd [#allocation9], 0
      %s57 = sshll.u32 %s4, 4
      %s58 = int_to_ptr.hbm [resolvable:$true] %s57
      %s59 = sshll.u32 [#allocation8], 4
      %s60 = int_to_ptr.vmem [resolvable:$true] %s59
      %65 = dma.hbm_to_vmem [thread:$0]  %s58, 4096, %s60, [#allocation9], 128, 128, 8
    $region21: #{_gc_block_flat.1} parent=1 // pred_fallthru
      _
    // Predicated region
    $region22: #{_gc_block_flat.1} parent=1 // pred_check
      _
    $region23: #{_gc_block_flat.1} parent=1 // pred_check_branch
      %67 = sbr.rel (0) target = $region25
    $region24: #{_gc_block_flat.1} parent=1 // pred_region
      _
    $region25: #{_gc_block_flat.1} parent=1 // pred_fallthru
      _
    // Predicated region
    $region26: #{_gc_block_flat.1} parent=1 // pred_check
      _
    $region27: #{_gc_block_flat.1} parent=1 // pred_check_branch
      %69 = sbr.rel (0) target = $region29
    $region28: #{_gc_block_flat.1} parent=1 // pred_region
      %71 = vsyncadd [#allocation9], 0
      %s73 = sshll.u32 %s6, 4
      %s74 = int_to_ptr.hbm [resolvable:$true] %s73
      %s75 = sshll.u32 [#allocation10], 4
      %s76 = int_to_ptr.vmem [resolvable:$true] %s75
      %78 = dma.hbm_to_vmem [thread:$0]  %s74, 32, %s76, [#allocation9]
    $region29: #{_gc_block_flat.1} parent=1 // pred_fallthru
      _
    // Predicated region
    $region30: #{_gc_block_flat.1} parent=1 // pred_check
      _
    $region31: #{_gc_block_flat.1} parent=1 // pred_check_branch
      %80 = sbr.rel (0) target = $region33
    $region32: #{_gc_block_flat.1} parent=1 // pred_region
      %82 = dma.done [#allocation3], 256
    $region33: #{_gc_block_flat.1} parent=1 // pred_fallthru
      _
    // Predicated region
    $region34: #{_gc_block_flat.1} parent=1 // pred_check
      _
    $region35: #{_gc_block_flat.1} parent=1 // pred_check_branch
      %84 = sbr.rel (0) target = $region37
    $region36: #{_gc_block_flat.1} parent=1 // pred_region
      %86 = dma.done [#allocation6], 4096
    $region37: #{_gc_block_flat.1} parent=1 // pred_fallthru
      _
    // Predicated region
    $region38: #{_gc_block_flat.1} parent=1 // pred_check
      _
    $region39: #{_gc_block_flat.1} parent=1 // pred_check_branch
      %88 = sbr.rel (0) target = $region41
    $region40: #{_gc_block_flat.1} parent=1 // pred_region
      %90 = dma.done [#allocation6], 32
    $region41: #{_gc_block_flat.1} parent=1 // pred_fallthru
      _
    // Predicated region
    $region42: #{_gc_block_flat.1} parent=1 // pred_check
      _
    $region43: #{_gc_block_flat.1} parent=1 // pred_check_branch
      %92 = sbr.rel (0) target = $region45
    $region44: #{_gc_block_flat.1} parent=1 // pred_region
      %94 = dma.done [#allocation9], 4096
    $region45: #{_gc_block_flat.1} parent=1 // pred_fallthru
      _
    // Predicated region
    $region46: #{_gc_block_flat.1} parent=1 // pred_check
      _
    $region47: #{_gc_block_flat.1} parent=1 // pred_check_branch
      %96 = sbr.rel (0) target = $region49
    $region48: #{_gc_block_flat.1} parent=1 // pred_region
      %98 = dma.done [#allocation9], 32
    $region49: #{_gc_block_flat.1} parent=1 // pred_fallthru
      _
    %v99 = vld [vmem:[#allocation2] sm:$0xff]
    %v100 = vld [vmem:[#allocation2 + $0x8] sm:$0xff]
    %v101 = vld [vmem:[#allocation5] sm:$0xff]
    %v102 = vld [vmem:[#allocation5 + $0x8] sm:$0xff]
    %v103 = vld [vmem:[#allocation5 + $0x10] sm:$0xff]
    %v104 = vld [vmem:[#allocation5 + $0x18] sm:$0xff]
    %v105 = vld [vmem:[#allocation5 + $0x20] sm:$0xff]
    %v106 = vld [vmem:[#allocation5 + $0x28] sm:$0xff]
    %v107 = vld [vmem:[#allocation5 + $0x30] sm:$0xff]
    %v108 = vld [vmem:[#allocation5 + $0x38] sm:$0xff]
    %v109 = vld [vmem:[#allocation5 + $0x40] sm:$0xff]
    %v110 = vld [vmem:[#allocation5 + $0x48] sm:$0xff]
    %v111 = vld [vmem:[#allocation5 + $0x50] sm:$0xff]
    %v112 = vld [vmem:[#allocation5 + $0x58] sm:$0xff]
    %v113 = vld [vmem:[#allocation5 + $0x60] sm:$0xff]
    %v114 = vld [vmem:[#allocation5 + $0x68] sm:$0xff]
    %v115 = vld [vmem:[#allocation5 + $0x70] sm:$0xff]
    %v116 = vld [vmem:[#allocation5 + $0x78] sm:$0xff]
    %v117 = vld [vmem:[#allocation5 + $0x80] sm:$0xff]
    %v118 = vld [vmem:[#allocation5 + $0x88] sm:$0xff]
    %v119 = vld [vmem:[#allocation5 + $0x90] sm:$0xff]
    %v120 = vld [vmem:[#allocation5 + $0x98] sm:$0xff]
    %v121 = vld [vmem:[#allocation5 + $0xa0] sm:$0xff]
    %v122 = vld [vmem:[#allocation5 + $0xa8] sm:$0xff]
    %v123 = vld [vmem:[#allocation5 + $0xb0] sm:$0xff]
    %v124 = vld [vmem:[#allocation5 + $0xb8] sm:$0xff]
    %v125 = vld [vmem:[#allocation5 + $0xc0] sm:$0xff]
    %v126 = vld [vmem:[#allocation5 + $0xc8] sm:$0xff]
    %v127 = vld [vmem:[#allocation5 + $0xd0] sm:$0xff]
    %v128 = vld [vmem:[#allocation5 + $0xd8] sm:$0xff]
    %v129 = vld [vmem:[#allocation5 + $0xe0] sm:$0xff]
    %v130 = vld [vmem:[#allocation5 + $0xe8] sm:$0xff]
    %v131 = vld [vmem:[#allocation5 + $0xf0] sm:$0xff]
    %v132 = vld [vmem:[#allocation5 + $0xf8] sm:$0xff]
    %v133 = vunpack.c.l.bf16 %v101
    %v134 = vunpack.c.h.bf16 %v101
    %v135 = vunpack.c.l.bf16 %v102
    %v136 = vunpack.c.h.bf16 %v102
    %v137 = vunpack.c.l.bf16 %v103
    %v138 = vunpack.c.h.bf16 %v103
    %v139 = vunpack.c.l.bf16 %v104
    %v140 = vunpack.c.h.bf16 %v104
    %v141 = vunpack.c.l.bf16 %v105
    %v142 = vunpack.c.h.bf16 %v105
    %v143 = vunpack.c.l.bf16 %v106
    %v144 = vunpack.c.h.bf16 %v106
    %v145 = vunpack.c.l.bf16 %v107
    %v146 = vunpack.c.h.bf16 %v107
    %v147 = vunpack.c.l.bf16 %v108
    %v148 = vunpack.c.h.bf16 %v108
    %v149 = vunpack.c.l.bf16 %v109
    %v150 = vunpack.c.h.bf16 %v109
    %v151 = vunpack.c.l.bf16 %v110
    %v152 = vunpack.c.h.bf16 %v110
    %v153 = vunpack.c.l.bf16 %v111
    %v154 = vunpack.c.h.bf16 %v111
    %v155 = vunpack.c.l.bf16 %v112
    %v156 = vunpack.c.h.bf16 %v112
    %v157 = vunpack.c.l.bf16 %v113
    %v158 = vunpack.c.h.bf16 %v113
    %v159 = vunpack.c.l.bf16 %v114
    %v160 = vunpack.c.h.bf16 %v114
    %v161 = vunpack.c.l.bf16 %v115
    %v162 = vunpack.c.h.bf16 %v115
    %v163 = vunpack.c.l.bf16 %v116
    %v164 = vunpack.c.h.bf16 %v116
    %v165 = vunpack.c.l.bf16 %v117
    %v166 = vunpack.c.h.bf16 %v117
    %v167 = vunpack.c.l.bf16 %v118
    %v168 = vunpack.c.h.bf16 %v118
    %v169 = vunpack.c.l.bf16 %v119
    %v170 = vunpack.c.h.bf16 %v119
    %v171 = vunpack.c.l.bf16 %v120
    %v172 = vunpack.c.h.bf16 %v120
    %v173 = vunpack.c.l.bf16 %v121
    %v174 = vunpack.c.h.bf16 %v121
    %v175 = vunpack.c.l.bf16 %v122
    %v176 = vunpack.c.h.bf16 %v122
    %v177 = vunpack.c.l.bf16 %v123
    %v178 = vunpack.c.h.bf16 %v123
    %v179 = vunpack.c.l.bf16 %v124
    %v180 = vunpack.c.h.bf16 %v124
    %v181 = vunpack.c.l.bf16 %v125
    %v182 = vunpack.c.h.bf16 %v125
    %v183 = vunpack.c.l.bf16 %v126
    %v184 = vunpack.c.h.bf16 %v126
    %v185 = vunpack.c.l.bf16 %v127
    %v186 = vunpack.c.h.bf16 %v127
    %v187 = vunpack.c.l.bf16 %v128
    %v188 = vunpack.c.h.bf16 %v128
    %v189 = vunpack.c.l.bf16 %v129
    %v190 = vunpack.c.h.bf16 %v129
    %v191 = vunpack.c.l.bf16 %v130
    %v192 = vunpack.c.h.bf16 %v130
    %v193 = vunpack.c.l.bf16 %v131
    %v194 = vunpack.c.h.bf16 %v131
    %v195 = vunpack.c.l.bf16 %v132
    %v196 = vunpack.c.h.bf16 %v132
    %197 = vmatpush.msra.mxu0 %v163
    %198 = vmatpush.msra.mxu0 %v161
    %199 = vmatpush.msra.mxu0 %v159
    %200 = vmatpush.msra.mxu0 %v157
    %201 = vmatpush.msra.mxu0 %v155
    %202 = vmatpush.msra.mxu0 %v153
    %203 = vmatpush.msra.mxu0 %v151
    %204 = vmatpush.msra.mxu0 %v149
    %205 = vmatpush.msra.mxu0 %v147
    %206 = vmatpush.msra.mxu0 %v145
    %207 = vmatpush.msra.mxu0 %v143
    %208 = vmatpush.msra.mxu0 %v141
    %209 = vmatpush.msra.mxu0 %v139
    %210 = vmatpush.msra.mxu0 %v137
    %211 = vmatpush.msra.mxu0 %v135
    %212 = vmatpush.msra.mxu0 %v133
    %213 = vmatmul.f32.gmra.mxu0 %v99
    %v214 = vpop.f32.mrf.mxu0
    %v215 = vadd.f32 0.0, %v214
    %216 = vdwg.mxu0
    %217 = vmatpush.msra.mxu0 %v195
    %218 = vmatpush.msra.mxu0 %v193
    %219 = vmatpush.msra.mxu0 %v191
    %220 = vmatpush.msra.mxu0 %v189
    %221 = vmatpush.msra.mxu0 %v187
    %222 = vmatpush.msra.mxu0 %v185
    %223 = vmatpush.msra.mxu0 %v183
    %224 = vmatpush.msra.mxu0 %v181
    %225 = vmatpush.msra.mxu0 %v179
    %226 = vmatpush.msra.mxu0 %v177
    %227 = vmatpush.msra.mxu0 %v175
    %228 = vmatpush.msra.mxu0 %v173
    %229 = vmatpush.msra.mxu0 %v171
    %230 = vmatpush.msra.mxu0 %v169
    %231 = vmatpush.msra.mxu0 %v167
    %232 = vmatpush.msra.mxu0 %v165
    %233 = vmatmul.f32.gmra.mxu0 %v100
    %v234 = vpop.f32.mrf.mxu0
    %v235 = vadd.f32 %v215, %v234
    %236 = vdwg.mxu0
    %237 = vmatpush.msra.mxu0 %v164
    %238 = vmatpush.msra.mxu0 %v162
    %239 = vmatpush.msra.mxu0 %v160
    %240 = vmatpush.msra.mxu0 %v158
    %241 = vmatpush.msra.mxu0 %v156
    %242 = vmatpush.msra.mxu0 %v154
    %243 = vmatpush.msra.mxu0 %v152
    %244 = vmatpush.msra.mxu0 %v150
    %245 = vmatpush.msra.mxu0 %v148
    %246 = vmatpush.msra.mxu0 %v146
    %247 = vmatpush.msra.mxu0 %v144
    %248 = vmatpush.msra.mxu0 %v142
    %249 = vmatpush.msra.mxu0 %v140
    %250 = vmatpush.msra.mxu0 %v138
    %251 = vmatpush.msra.mxu0 %v136
    %252 = vmatpush.msra.mxu0 %v134
    %253 = vmatmul.f32.gmra.mxu0 %v99
    %v254 = vpop.f32.mrf.mxu0
    %v255 = vadd.f32 0.0, %v254
    %256 = vdwg.mxu0
    %257 = vmatpush.msra.mxu0 %v196
    %258 = vmatpush.msra.mxu0 %v194
    %259 = vmatpush.msra.mxu0 %v192
    %260 = vmatpush.msra.mxu0 %v190
    %261 = vmatpush.msra.mxu0 %v188
    %262 = vmatpush.msra.mxu0 %v186
    %263 = vmatpush.msra.mxu0 %v184
    %264 = vmatpush.msra.mxu0 %v182
    %265 = vmatpush.msra.mxu0 %v180
    %266 = vmatpush.msra.mxu0 %v178
    %267 = vmatpush.msra.mxu0 %v176
    %268 = vmatpush.msra.mxu0 %v174
    %269 = vmatpush.msra.mxu0 %v172
    %270 = vmatpush.msra.mxu0 %v170
    %271 = vmatpush.msra.mxu0 %v168
    %272 = vmatpush.msra.mxu0 %v166
    %273 = vmatmul.f32.gmra.mxu0 %v100
    %v274 = vpop.f32.mrf.mxu0
    %v275 = vadd.f32 %v255, %v274
    %276 = vdwg.mxu0
    %v277 = vld [vmem:[#allocation7] sm:$0x3]
    %v278 = vld [vmem:[%s3] sm:$0x3]
    %v279 = vrot.slane %v235, 4
    %v280 = vadd.f32 %v235, %v279
    %v281 = vrot.slane %v280, 2
    %v282 = vadd.f32 %v280, %v281
    %v283 = vrot.slane %v282, 1
    %v284 = vadd.f32 %v282, %v283
    %v285 = vrot.slane %v275, 4
    %v286 = vadd.f32 %v275, %v285
    %v287 = vrot.slane %v286, 2
    %v288 = vadd.f32 %v286, %v287
    %v289 = vrot.slane %v288, 1
    %v290 = vadd.f32 %v288, %v289
    %v291 = vrcp.pop 8.0
    %v292 = vmul.f32 8.0, %v291
    %v293 = vsub.f32 1.0, %v292
    %v294 = vmul.f32 %v291, %v293
    %v295 = vadd.f32 %v291, %v294
    %vm296 = vweird.f32 %v291
    %v297 = vsel %vm296, %v291, %v295
    %v298 = vmul.f32 %v284, %v297
    %v299 = vmul.f32 %v290, %v297
    %v300 = vsub.f32 %v235, %v298
    %v301 = vsub.f32 %v275, %v299
    %v302 = vmul.f32 %v300, %v300
    %v303 = vmul.f32 %v301, %v301
    %v304 = vrot.slane %v302, 4
    %v305 = vadd.f32 %v302, %v304
    %v306 = vrot.slane %v305, 2
    %v307 = vadd.f32 %v305, %v306
    %v308 = vrot.slane %v307, 1
    %v309 = vadd.f32 %v307, %v308
    %v310 = vrot.slane %v303, 4
    %v311 = vadd.f32 %v303, %v310
    %v312 = vrot.slane %v311, 2
    %v313 = vadd.f32 %v311, %v312
    %v314 = vrot.slane %v313, 1
    %v315 = vadd.f32 %v313, %v314
    %v316 = vmul.f32 %v309, %v297
    %v317 = vmul.f32 %v315, %v297
    %v318 = vadd.f32 %v316, 1e-05
    %v319 = vadd.f32 %v317, 1e-05
    %v320 = vrsqrt.pop %v318
    %v321 = vmul.f32 %v320, %v318
    %v322 = vmul.f32 %v321, %v320
    %v323 = vmul.f32 0.5, %v322
    %v324 = vsub.f32 1.5, %v323
    %v325 = vmul.f32 %v320, %v324
    %vm326 = vweird.f32 %v318
    %vm327 = vweird.f32 %v320
    %vm328 = vmor %vm326, %vm327
    %v329 = vsel %vm328, %v320, %v325
    %v330 = vrsqrt.pop %v319
    %v331 = vmul.f32 %v330, %v319
    %v332 = vmul.f32 %v331, %v330
    %v333 = vmul.f32 0.5, %v332
    %v334 = vsub.f32 1.5, %v333
    %v335 = vmul.f32 %v330, %v334
    %vm336 = vweird.f32 %v319
    %vm337 = vweird.f32 %v330
    %vm338 = vmor %vm336, %vm337
    %v339 = vsel %vm338, %v330, %v335
    %v341 = vperm.slane %v277, 0
    %v342 = vperm.slane %v277, 1
    %v345 = vmul.f32 %v329, %v341
    %v346 = vmul.f32 %v339, %v342
    %v347 = vperm.slane %v345, 0
    %v348 = vperm.slane %v346, 0
    %v349 = vmul.f32 %v300, %v347
    %v350 = vmul.f32 %v301, %v348
    %v352 = vperm.slane %v278, 0
    %v353 = vperm.slane %v278, 1
    %v356 = vadd.f32 %v349, %v352
    %v357 = vadd.f32 %v350, %v353
    %v358 = vmul.f32 %v356, 0.01
    %v359 = vmul.f32 %v357, 0.01
    %v360 = vmax.f32 %v356, %v358
    %v361 = vmax.f32 %v357, %v359
    %v362 = vld [vmem:[#allocation8] sm:$0xff]
    %v363 = vld [vmem:[#allocation8 + $0x8] sm:$0xff]
    %v364 = vld [vmem:[#allocation8 + $0x10] sm:$0xff]
    %v365 = vld [vmem:[#allocation8 + $0x18] sm:$0xff]
    %v366 = vld [vmem:[#allocation8 + $0x20] sm:$0xff]
    %v367 = vld [vmem:[#allocation8 + $0x28] sm:$0xff]
    %v368 = vld [vmem:[#allocation8 + $0x30] sm:$0xff]
    %v369 = vld [vmem:[#allocation8 + $0x38] sm:$0xff]
    %v370 = vld [vmem:[#allocation8 + $0x40] sm:$0xff]
    %v371 = vld [vmem:[#allocation8 + $0x48] sm:$0xff]
    %v372 = vld [vmem:[#allocation8 + $0x50] sm:$0xff]
    %v373 = vld [vmem:[#allocation8 + $0x58] sm:$0xff]
    %v374 = vld [vmem:[#allocation8 + $0x60] sm:$0xff]
    %v375 = vld [vmem:[#allocation8 + $0x68] sm:$0xff]
    %v376 = vld [vmem:[#allocation8 + $0x70] sm:$0xff]
    %v377 = vld [vmem:[#allocation8 + $0x78] sm:$0xff]
    %v378 = vld [vmem:[#allocation8 + $0x80] sm:$0xff]
    %v379 = vld [vmem:[#allocation8 + $0x88] sm:$0xff]
    %v380 = vld [vmem:[#allocation8 + $0x90] sm:$0xff]
    %v381 = vld [vmem:[#allocation8 + $0x98] sm:$0xff]
    %v382 = vld [vmem:[#allocation8 + $0xa0] sm:$0xff]
    %v383 = vld [vmem:[#allocation8 + $0xa8] sm:$0xff]
    %v384 = vld [vmem:[#allocation8 + $0xb0] sm:$0xff]
    %v385 = vld [vmem:[#allocation8 + $0xb8] sm:$0xff]
    %v386 = vld [vmem:[#allocation8 + $0xc0] sm:$0xff]
    %v387 = vld [vmem:[#allocation8 + $0xc8] sm:$0xff]
    %v388 = vld [vmem:[#allocation8 + $0xd0] sm:$0xff]
    %v389 = vld [vmem:[#allocation8 + $0xd8] sm:$0xff]
    %v390 = vld [vmem:[#allocation8 + $0xe0] sm:$0xff]
    %v391 = vld [vmem:[#allocation8 + $0xe8] sm:$0xff]
    %v392 = vld [vmem:[#allocation8 + $0xf0] sm:$0xff]
    %v393 = vld [vmem:[#allocation8 + $0xf8] sm:$0xff]
    %v394 = vunpack.c.l.bf16 %v362
    %v395 = vunpack.c.h.bf16 %v362
    %v396 = vunpack.c.l.bf16 %v363
    %v397 = vunpack.c.h.bf16 %v363
    %v398 = vunpack.c.l.bf16 %v364
    %v399 = vunpack.c.h.bf16 %v364
    %v400 = vunpack.c.l.bf16 %v365
    %v401 = vunpack.c.h.bf16 %v365
    %v402 = vunpack.c.l.bf16 %v366
    %v403 = vunpack.c.h.bf16 %v366
    %v404 = vunpack.c.l.bf16 %v367
    %v405 = vunpack.c.h.bf16 %v367
    %v406 = vunpack.c.l.bf16 %v368
    %v407 = vunpack.c.h.bf16 %v368
    %v408 = vunpack.c.l.bf16 %v369
    %v409 = vunpack.c.h.bf16 %v369
    %v410 = vunpack.c.l.bf16 %v370
    %v411 = vunpack.c.h.bf16 %v370
    %v412 = vunpack.c.l.bf16 %v371
    %v413 = vunpack.c.h.bf16 %v371
    %v414 = vunpack.c.l.bf16 %v372
    %v415 = vunpack.c.h.bf16 %v372
    %v416 = vunpack.c.l.bf16 %v373
    %v417 = vunpack.c.h.bf16 %v373
    %v418 = vunpack.c.l.bf16 %v374
    %v419 = vunpack.c.h.bf16 %v374
    %v420 = vunpack.c.l.bf16 %v375
    %v421 = vunpack.c.h.bf16 %v375
    %v422 = vunpack.c.l.bf16 %v376
    %v423 = vunpack.c.h.bf16 %v376
    %v424 = vunpack.c.l.bf16 %v377
    %v425 = vunpack.c.h.bf16 %v377
    %v426 = vunpack.c.l.bf16 %v378
    %v427 = vunpack.c.h.bf16 %v378
    %v428 = vunpack.c.l.bf16 %v379
    %v429 = vunpack.c.h.bf16 %v379
    %v430 = vunpack.c.l.bf16 %v380
    %v431 = vunpack.c.h.bf16 %v380
    %v432 = vunpack.c.l.bf16 %v381
    %v433 = vunpack.c.h.bf16 %v381
    %v434 = vunpack.c.l.bf16 %v382
    %v435 = vunpack.c.h.bf16 %v382
    %v436 = vunpack.c.l.bf16 %v383
    %v437 = vunpack.c.h.bf16 %v383
    %v438 = vunpack.c.l.bf16 %v384
    %v439 = vunpack.c.h.bf16 %v384
    %v440 = vunpack.c.l.bf16 %v385
    %v441 = vunpack.c.h.bf16 %v385
    %v442 = vunpack.c.l.bf16 %v386
    %v443 = vunpack.c.h.bf16 %v386
    %v444 = vunpack.c.l.bf16 %v387
    %v445 = vunpack.c.h.bf16 %v387
    %v446 = vunpack.c.l.bf16 %v388
    %v447 = vunpack.c.h.bf16 %v388
    %v448 = vunpack.c.l.bf16 %v389
    %v449 = vunpack.c.h.bf16 %v389
    %v450 = vunpack.c.l.bf16 %v390
    %v451 = vunpack.c.h.bf16 %v390
    %v452 = vunpack.c.l.bf16 %v391
    %v453 = vunpack.c.h.bf16 %v391
    %v454 = vunpack.c.l.bf16 %v392
    %v455 = vunpack.c.h.bf16 %v392
    %v456 = vunpack.c.l.bf16 %v393
    %v457 = vunpack.c.h.bf16 %v393
    %458 = vmatpush.msra.mxu0 %v424
    %459 = vmatpush.msra.mxu0 %v422
    %460 = vmatpush.msra.mxu0 %v420
    %461 = vmatpush.msra.mxu0 %v418
    %462 = vmatpush.msra.mxu0 %v416
    %463 = vmatpush.msra.mxu0 %v414
    %464 = vmatpush.msra.mxu0 %v412
    %465 = vmatpush.msra.mxu0 %v410
    %466 = vmatpush.msra.mxu0 %v408
    %467 = vmatpush.msra.mxu0 %v406
    %468 = vmatpush.msra.mxu0 %v404
    %469 = vmatpush.msra.mxu0 %v402
    %470 = vmatpush.msra.mxu0 %v400
    %471 = vmatpush.msra.mxu0 %v398
    %472 = vmatpush.msra.mxu0 %v396
    %473 = vmatpush.msra.mxu0 %v394
    %474 = vmatmul.f32.gmra.mxu0 %v360
    %v475 = vpop.f32.mrf.mxu0
    %v476 = vadd.f32 0.0, %v475
    %477 = vdwg.mxu0
    %478 = vmatpush.msra.mxu0 %v456
    %479 = vmatpush.msra.mxu0 %v454
    %480 = vmatpush.msra.mxu0 %v452
    %481 = vmatpush.msra.mxu0 %v450
    %482 = vmatpush.msra.mxu0 %v448
    %483 = vmatpush.msra.mxu0 %v446
    %484 = vmatpush.msra.mxu0 %v444
    %485 = vmatpush.msra.mxu0 %v442
    %486 = vmatpush.msra.mxu0 %v440
    %487 = vmatpush.msra.mxu0 %v438
    %488 = vmatpush.msra.mxu0 %v436
    %489 = vmatpush.msra.mxu0 %v434
    %490 = vmatpush.msra.mxu0 %v432
    %491 = vmatpush.msra.mxu0 %v430
    %492 = vmatpush.msra.mxu0 %v428
    %493 = vmatpush.msra.mxu0 %v426
    %494 = vmatmul.f32.gmra.mxu0 %v361
    %v495 = vpop.f32.mrf.mxu0
    %v496 = vadd.f32 %v476, %v495
    %497 = vdwg.mxu0
    %498 = vmatpush.msra.mxu0 %v425
    %499 = vmatpush.msra.mxu0 %v423
    %500 = vmatpush.msra.mxu0 %v421
    %501 = vmatpush.msra.mxu0 %v419
    %502 = vmatpush.msra.mxu0 %v417
    %503 = vmatpush.msra.mxu0 %v415
    %504 = vmatpush.msra.mxu0 %v413
    %505 = vmatpush.msra.mxu0 %v411
    %506 = vmatpush.msra.mxu0 %v409
    %507 = vmatpush.msra.mxu0 %v407
    %508 = vmatpush.msra.mxu0 %v405
    %509 = vmatpush.msra.mxu0 %v403
    %510 = vmatpush.msra.mxu0 %v401
    %511 = vmatpush.msra.mxu0 %v399
    %512 = vmatpush.msra.mxu0 %v397
    %513 = vmatpush.msra.mxu0 %v395
    %514 = vmatmul.f32.gmra.mxu0 %v360
    %v515 = vpop.f32.mrf.mxu0
    %v516 = vadd.f32 0.0, %v515
    %517 = vdwg.mxu0
    %518 = vmatpush.msra.mxu0 %v457
    %519 = vmatpush.msra.mxu0 %v455
    %520 = vmatpush.msra.mxu0 %v453
    %521 = vmatpush.msra.mxu0 %v451
    %522 = vmatpush.msra.mxu0 %v449
    %523 = vmatpush.msra.mxu0 %v447
    %524 = vmatpush.msra.mxu0 %v445
    %525 = vmatpush.msra.mxu0 %v443
    %526 = vmatpush.msra.mxu0 %v441
    %527 = vmatpush.msra.mxu0 %v439
    %528 = vmatpush.msra.mxu0 %v437
    %529 = vmatpush.msra.mxu0 %v435
    %530 = vmatpush.msra.mxu0 %v433
    %531 = vmatpush.msra.mxu0 %v431
    %532 = vmatpush.msra.mxu0 %v429
    %533 = vmatpush.msra.mxu0 %v427
    %534 = vmatmul.f32.gmra.mxu0 %v361
    %v535 = vpop.f32.mrf.mxu0
    %v536 = vadd.f32 %v516, %v535
    %537 = vdwg.mxu0
    %v538 = vld [vmem:[%s5] sm:$0x3]
    %v539 = vld [vmem:[#allocation10] sm:$0x3]
    %v540 = vrot.slane %v496, 4
    %v541 = vadd.f32 %v496, %v540
    %v542 = vrot.slane %v541, 2
    %v543 = vadd.f32 %v541, %v542
    %v544 = vrot.slane %v543, 1
    %v545 = vadd.f32 %v543, %v544
    %v546 = vrot.slane %v536, 4
    %v547 = vadd.f32 %v536, %v546
    %v548 = vrot.slane %v547, 2
    %v549 = vadd.f32 %v547, %v548
    %v550 = vrot.slane %v549, 1
    %v551 = vadd.f32 %v549, %v550
    %v552 = vmul.f32 %v545, %v297
    %v553 = vmul.f32 %v551, %v297
    %v554 = vsub.f32 %v496, %v552
    %v555 = vsub.f32 %v536, %v553
    %v556 = vmul.f32 %v554, %v554
    %v557 = vmul.f32 %v555, %v555
    %v558 = vrot.slane %v556, 4
    %v559 = vadd.f32 %v556, %v558
    %v560 = vrot.slane %v559, 2
    %v561 = vadd.f32 %v559, %v560
    %v562 = vrot.slane %v561, 1
    %v563 = vadd.f32 %v561, %v562
    %v564 = vrot.slane %v557, 4
    %v565 = vadd.f32 %v557, %v564
    %v566 = vrot.slane %v565, 2
    %v567 = vadd.f32 %v565, %v566
    %v568 = vrot.slane %v567, 1
    %v569 = vadd.f32 %v567, %v568
    %v570 = vmul.f32 %v563, %v297
    %v571 = vmul.f32 %v569, %v297
    %v572 = vadd.f32 %v570, 1e-05
    %v573 = vadd.f32 %v571, 1e-05
    %v574 = vrsqrt.pop %v572
    %v575 = vmul.f32 %v574, %v572
    %v576 = vmul.f32 %v575, %v574
    %v577 = vmul.f32 0.5, %v576
    %v578 = vsub.f32 1.5, %v577
    %v579 = vmul.f32 %v574, %v578
    %vm580 = vweird.f32 %v572
    %vm581 = vweird.f32 %v574
    %vm582 = vmor %vm580, %vm581
    %v583 = vsel %vm582, %v574, %v579
    %v584 = vrsqrt.pop %v573
    %v585 = vmul.f32 %v584, %v573
    %v586 = vmul.f32 %v585, %v584
    %v587 = vmul.f32 0.5, %v586
    %v588 = vsub.f32 1.5, %v587
    %v589 = vmul.f32 %v584, %v588
    %vm590 = vweird.f32 %v573
    %vm591 = vweird.f32 %v584
    %vm592 = vmor %vm590, %vm591
    %v593 = vsel %vm592, %v584, %v589
    %v595 = vperm.slane %v538, 0
    %v596 = vperm.slane %v538, 1
    %v599 = vmul.f32 %v583, %v595
    %v600 = vmul.f32 %v593, %v596
    %v601 = vperm.slane %v599, 0
    %v602 = vperm.slane %v600, 0
    %v603 = vmul.f32 %v554, %v601
    %v604 = vmul.f32 %v555, %v602
    %v606 = vperm.slane %v539, 0
    %v607 = vperm.slane %v539, 1
    %v610 = vadd.f32 %v603, %v606
    %v611 = vadd.f32 %v604, %v607
    %v612 = vmul.f32 %v610, 0.01
    %v613 = vmul.f32 %v611, 0.01
    %v614 = vmax.f32 %v610, %v612
    %v615 = vmax.f32 %v611, %v613
    %v616 = vadd.f32 %v614, %v99
    %v617 = vadd.f32 %v615, %v100
    %618 = vst [vmem:[#allocation11] sm:$0xff] %v616
    %619 = vst [vmem:[#allocation11 + $0x8] sm:$0xff] %v617
    // Predicated region
    $region50: #{_gc_block_flat.1} parent=1 // pred_check
      _
    $region51: #{_gc_block_flat.1} parent=1 // pred_check_branch
      %621 = sbr.rel (0) target = $region53
    $region52: #{_gc_block_flat.1} parent=1 // pred_region
      %623 = vsyncadd [#allocation4], 0
      %s625 = sshll.u32 [#allocation11], 4
      %s626 = int_to_ptr.vmem [resolvable:$true] %s625
      %s627 = sshll.u32 %s7, 4
      %s628 = int_to_ptr.hbm [resolvable:$true] %s627
      %630 = dma.vmem_to_hbm [thread:$0]  %s626, 256, %s628, [#allocation4]
    $region53: #{_gc_block_flat.1} parent=1 // pred_fallthru
      _
    // Predicated region
    $region54: #{_gc_block_flat.1} parent=1 // pred_check
      _
    $region55: #{_gc_block_flat.1} parent=1 // pred_check_branch
      %632 = sbr.rel (0) target = $region57
    $region56: #{_gc_block_flat.1} parent=1 // pred_region
      %634 = dma.done [#allocation4], 256
    $region57: #{_gc_block_flat.1} parent=1 // pred_fallthru
      _
    %635 = vsyncpa [#allocation3], 1
    %636 = vsyncpa [#allocation6], 1
    %637 = vsyncpa [#allocation9], 1
    %638 = vsyncpa [#allocation4], 1

</llo_original>
